<compile_context>
chip_gen: v6e
topology: v6e:2x2x1
jax: 0.10.0
libtpu: 0.0.40
codegen_flags: <defaults>
</compile_context>

<pallas_src>
import functools

import jax
import jax.numpy as jnp
from jax.experimental import pallas as pl
from jax.experimental.pallas import tpu as pltpu


# ---------------------------------------------------------------------------
# Kernel
# ---------------------------------------------------------------------------
def _flash_fwd_kernel(q_ref, k_ref, v_ref, o_ref, m_sc, l_sc, acc_sc, *,
                      scale, scale_in_kernel, kv_len, exp_in_bf16):
    kv = pl.program_id(2)

    @pl.when(kv == 0)
    def _():
        m_sc[...] = jnp.full_like(m_sc, -jnp.inf)
        l_sc[...] = jnp.zeros_like(l_sc)
        acc_sc[...] = jnp.zeros_like(acc_sc)

    q = q_ref[...]                                       # (TQ, D) bf16
    if scale_in_kernel:
        # Only for bf16 callers (f32 callers get the scale folded into the
        # wrapper-side cast).  Scaling q is TQ*D multiplies vs TQ*TK for s.
        q = q * jnp.asarray(scale, dtype=q.dtype)
    k = k_ref[...]                                       # (TK, D) bf16

    # Contract over D directly (no k.T relayout); f32 accumulation on the MXU.
    s = jax.lax.dot_general(q, k, (((1,), (1,)), ((), ())),
                            preferred_element_type=jnp.float32)  # (TQ, TK)

    if kv_len is not None:
        # Ragged-sequence path: mask padded key positions.
        tk = k.shape[0]
        kpos = kv * tk + jax.lax.broadcasted_iota(jnp.int32, (1, tk), 1)
        s = jnp.where(kpos < kv_len, s, -1e30)

    m_prev = m_sc[...]                                   # (TQ, 128) lane-dense
    m_new = jnp.maximum(m_prev, jnp.max(s, axis=-1, keepdims=True))
    alpha = jnp.exp(m_prev - m_new)                      # (TQ, 128)

    m_row = m_new if s.shape[-1] == m_new.shape[-1] else m_new[:, :1]
    sm = s - m_row                                       # (TQ, TK) f32
    if exp_in_bf16:
        # bf16 EUP path (v6e/v7x): p is already bf16 for the PV matmul.
        p_lo = jnp.exp(sm.astype(jnp.bfloat16))
        p_f32 = p_lo.astype(jnp.float32)
    else:
        # v5 and older: no bf16 EUP, keep exp in f32.
        p_f32 = jnp.exp(sm)
        p_lo = p_f32.astype(v_ref.dtype)

    # l must stay f32 for long-sequence denominator precision.
    l_sc[...] = alpha * l_sc[...] + jnp.sum(p_f32, axis=-1, keepdims=True)

    a_row = alpha if acc_sc.shape[-1] == alpha.shape[-1] else alpha[:, :1]
    acc_sc[...] = a_row * acc_sc[...] + jnp.dot(
        p_lo, v_ref[...], preferred_element_type=jnp.float32)
    m_sc[...] = m_new

    @pl.when(kv == pl.num_programs(2) - 1)
    def _():
        l = l_sc[...]
        l_row = l if acc_sc.shape[-1] == l.shape[-1] else l[:, :1]
        inv_l = pl.reciprocal(l_row, approx=True)        # EUP slot
        o_ref[...] = (acc_sc[...] * inv_l).astype(o_ref.dtype)


# ---------------------------------------------------------------------------
# Tiling / device heuristics
# ---------------------------------------------------------------------------
_TILE_CANDIDATES = (1024, 512, 256, 128, 64, 32, 16, 8)


def _device_kind():
    try:
        return jax.devices()[0].device_kind.lower()
    except Exception:
        return ""


def _tile_caps():
    """(tq_cap, tk_cap).  Big TQ makes long sequences compute-bound; TK stays
    matched to the MXU contraction shape (128 on v5 and older, 256 on v6e+)."""
    kind = _device_kind()
    if any(t in kind for t in ("v2", "v3", "v4")):
        return 256, 128
    if "v5" in kind:
        return 512, 128
    return 512, 256  # v6e / v7x / unknown future gen


def _exp_in_bf16():
    kind = _device_kind()
    return not any(t in kind for t in ("v2", "v3", "v4", "v5"))


def _pick_divisible(n, cap):
    for t in _TILE_CANDIDATES:
        if t <= cap and n % t == 0:
            return t
    return None


def _choose_tiles(sq, tq_cap, tk_cap):
    """Returns (tq, tk, padded_sq)."""
    tq = _pick_divisible(sq, tq_cap)
    tk = _pick_divisible(sq, tk_cap)
    if tq is not None and tk is not None:
        return tq, tk, sq
    # Ragged sequence: pad up to a single common tile.  padding < tile, so no
    # KV block is ever fully masked; padded keys are masked in-kernel.
    t = int(min(tq_cap, tk_cap, max(8, pl.next_power_of_2(sq))))
    padded = pl.cdiv(sq, t) * t
    return t, t, padded


# ---------------------------------------------------------------------------
# Wrapper
# ---------------------------------------------------------------------------
def flash_attention_seqmajor(q, k, v, *, bh, d, tq=None, tk=None):
    """q, k, v, out: [sq, bh * d] (seq-major, per-(batch,head) d-wide strips)."""
    sq = q.shape[0]
    assert q.shape == (sq, bh * d) and k.shape == q.shape and v.shape == q.shape
    assert d % 128 == 0, "head_dim must be lane-aligned (multiple of 128)"

    out_dtype = q.dtype
    compute_dtype = jnp.bfloat16
    scale = float(d) ** (-0.5)

    # Cast to bf16 at the boundary (MXU-native dtype, halves K/V HBM traffic
    # for f32 callers).  Fold the softmax scale into the cast when possible.
    if q.dtype == compute_dtype:
        scale_in_kernel = True
        qc = q
    else:
        scale_in_kernel = False
        qc = (q.astype(jnp.float32) * scale).astype(compute_dtype)
    kc = k.astype(compute_dtype)
    vc = v.astype(compute_dtype)

    tq_cap, tk_cap = _tile_caps()
    atq, atk, sq_p = _choose_tiles(sq, tq_cap, tk_cap)
    if tq is not None:
        assert sq_p % tq == 0
        atq = tq
    if tk is not None:
        assert sq_p % tk == 0
        atk = tk

    kv_len = None
    if sq_p != sq:
        pad = sq_p - sq
        qc = jnp.pad(qc, ((0, pad), (0, 0)))
        kc = jnp.pad(kc, ((0, pad), (0, 0)))
        vc = jnp.pad(vc, ((0, pad), (0, 0)))
        kv_len = sq

    grid = (bh, sq_p // atq, sq_p // atk)
    kernel = functools.partial(
        _flash_fwd_kernel,
        scale=scale,
        scale_in_kernel=scale_in_kernel,
        kv_len=kv_len,
        exp_in_bf16=_exp_in_bf16(),
    )

    # Scheduling hints + explicit VMEM budget (needed when tiles are enlarged;
    # default scoped limit is 16 MiB on v5e / 32 MiB on v6e & v7x).
    itemsize_in = 2
    itemsize_out = jnp.dtype(out_dtype).itemsize
    kv_rereads = sq_p // atq
    flops = 4 * bh * sq_p * sq_p * d
    transcendentals = bh * sq_p * sq_p
    bytes_accessed = (bh * sq_p * d) * (itemsize_in * (1 + 2 * kv_rereads)
                                        + itemsize_out)
    footprint = (
        2 * (atq * d + 2 * atk * d) * itemsize_in   # double-buffered q/k/v blocks
        + 2 * atq * d * itemsize_out                # double-buffered out block
        + (2 * atq * 128 + atq * d) * 4             # m/l/acc scratch (f32)
    )
    vmem_limit = int(min(48 * 1024 * 1024, max(32 * 1024 * 1024, 4 * footprint)))

    out = pl.pallas_call(
        kernel,
        out_shape=jax.ShapeDtypeStruct((sq_p, bh * d), out_dtype),
        grid_spec=pltpu.PrefetchScalarGridSpec(
            num_scalar_prefetch=0,
            grid=grid,
            in_specs=[
                pl.BlockSpec((atq, d), lambda b, qi, ki: (qi, b)),
                pl.BlockSpec((atk, d), lambda b, qi, ki: (ki, b)),
                pl.BlockSpec((atk, d), lambda b, qi, ki: (ki, b)),
            ],
            out_specs=pl.BlockSpec((atq, d), lambda b, qi, ki: (qi, b)),
            scratch_shapes=[
                pltpu.VMEM((atq, 128), jnp.float32),  # running max (lane-dense)
                pltpu.VMEM((atq, 128), jnp.float32),  # running denom (lane-dense)
                pltpu.VMEM((atq, d), jnp.float32),    # running numerator
            ],
        ),
        compiler_params=pltpu.CompilerParams(
            dimension_semantics=("parallel", "parallel", "arbitrary"),
            vmem_limit_bytes=vmem_limit,
        ),
        cost_estimate=pl.CostEstimate(
            flops=int(flops),
            transcendentals=int(transcendentals),
            bytes_accessed=int(bytes_accessed),
        ),
    )(qc, kc, vc)

    if sq_p != sq:
        out = out[:sq]
    return out


def fast_core_attention_forward(query_layer, key_layer, value_layer,
                                attention_mask=None, *, tq=None, tk=None):
    """Mirrors FastCoreAttention.forward for the 'hyper' branch (mask=None, sq==sk).

    Inputs:  [seq, batch, num_heads, head_dim]
    Output:  [seq, batch, num_heads * head_dim]
    """
    assert attention_mask is None
    sq, b, h, d = query_layer.shape
    bh = b * h

    # Contiguous (free) reshape; no HBM-level transpose.
    q2 = query_layer.reshape(sq, bh * d)
    k2 = key_layer.reshape(sq, bh * d)
    v2 = value_layer.reshape(sq, bh * d)

    out2 = flash_attention_seqmajor(q2, k2, v2, bh=bh, d=d, tq=tq, tk=tk)

    # out2[s, (b*h + h_)*d + d_] == ctx[b, h_, s, d_] -> exactly the module's
    # permute(2,0,1,3).reshape(sq, b, h*d); this reshape is also free.
    return out2.reshape(sq, b, h * d)


# ---------------------------------------------------------------------------
# Reference + test
# ---------------------------------------------------------------------------
def _reference(query_layer, key_layer, value_layer):
    sq, b, h, d = query_layer.shape
    q = jnp.transpose(query_layer, (1, 2, 0, 3)).astype(jnp.float32)
    k = jnp.transpose(key_layer, (1, 2, 0, 3)).astype(jnp.float32)
    v = jnp.transpose(value_layer, (1, 2, 0, 3)).astype(jnp.float32)
    scale = d ** (-0.5)
    s = jnp.einsum("bhqd,bhkd->bhqk", q, k) * scale
    p = jax.nn.softmax(s, axis=-1)
    ctx = jnp.einsum("bhqk,bhkd->bhqd", p, v)
    ctx = jnp.transpose(ctx, (2, 0, 1, 3)).reshape(sq, b, h * d)
    return ctx


if __name__ == "__main__":
    # Module-implied config: num_attention_heads=2, head_dim=128
    # (HyperAttention input_dim=128), seq=128, batch=2.
    seq, batch, heads, head_dim = 128, 2, 2, 128

    key = jax.random.PRNGKey(0)
    kq, kk, kv = jax.random.split(key, 3)
    # inputs: [seq, batch, num_heads, head_dim]
    q = jax.random.normal(kq, (seq, batch, heads, head_dim), dtype=jnp.float32)
    k = jax.random.normal(kk, (seq, batch, heads, head_dim), dtype=jnp.float32)
    v = jax.random.normal(kv, (seq, batch, heads, head_dim), dtype=jnp.float32)

    out = fast_core_attention_forward(q, k, v, attention_mask=None)
    out = jax.block_until_ready(out)

    ref = _reference(q, k, v)
    assert out.shape == (seq, batch, heads * head_dim)
    # Compute runs in bf16 (matmuls + exp) with f32 accumulation -> tolerance
    # reflects bf16 rounding, not an algorithmic difference.
    assert jnp.allclose(out, ref, atol=3e-2, rtol=3e-2), "mismatch vs reference"

    print("KERNEL_OK")
</pallas_src>

<mosaic_0001>
module attributes {stable_mosaic.version = 11 : i64} {
  func.func @_flash_fwd_kernel(%arg0: i32, %arg1: i32, %arg2: i32, %arg3: memref<128x128xbf16, #tpu.memory_space<vmem>>, %arg4: memref<128x128xbf16, #tpu.memory_space<vmem>>, %arg5: memref<128x128xbf16, #tpu.memory_space<vmem>>, %arg6: memref<128x128xf32, #tpu.memory_space<vmem>>, %arg7: memref<128x128xf32, #tpu.memory_space<vmem>>, %arg8: memref<128x128xf32, #tpu.memory_space<vmem>>, %arg9: memref<128x128xf32, #tpu.memory_space<vmem>>) attributes {dimension_semantics = [#tpu.dimension_semantics<parallel>, #tpu.dimension_semantics<parallel>, #tpu.dimension_semantics<arbitrary>], iteration_bounds = array<i64: 4, 1, 1>, scalar_prefetch = 0 : i64, scratch_operands = 3 : i64, tpu.core_type = #tpu.core_type<tc>, window_params = [{transform_indices = @transform_0, window_bounds = array<i64: 128, 128>}, {transform_indices = @transform_1, window_bounds = array<i64: 128, 128>}, {transform_indices = @transform_2, window_bounds = array<i64: 128, 128>}, {transform_indices = @transform_3, window_bounds = array<i64: 128, 128>}]} {
    %c0_i32 = arith.constant 0 : i32
    %0 = arith.cmpi eq, %arg2, %c0_i32 : i32
    %1 = arith.extui %0 : i1 to i32
    %c0_i32_0 = arith.constant 0 : i32
    %2 = arith.cmpi ne, %1, %c0_i32_0 : i32
    scf.if %2 {
      %cst_23 = arith.constant 0xFF800000 : f32
      %34 = vector.broadcast %cst_23 : f32 to vector<128x128xf32>
      %c0_24 = arith.constant 0 : index
      %c0_25 = arith.constant 0 : index
      %35 = vector.load %arg7[%c0_24, %c0_25] : memref<128x128xf32, #tpu.memory_space<vmem>>, vector<128x128xf32>
      tpu.vector_store %arg7[%c0_24, %c0_25], %34 {strides = array<i32>} : memref<128x128xf32, #tpu.memory_space<vmem>>, vector<128x128xf32>,
      %cst_26 = arith.constant 0.000000e+00 : f32
      %36 = vector.broadcast %cst_26 : f32 to vector<128x128xf32>
      %c0_27 = arith.constant 0 : index
      %c0_28 = arith.constant 0 : index
      %37 = vector.load %arg8[%c0_27, %c0_28] : memref<128x128xf32, #tpu.memory_space<vmem>>, vector<128x128xf32>
      tpu.vector_store %arg8[%c0_27, %c0_28], %36 {strides = array<i32>} : memref<128x128xf32, #tpu.memory_space<vmem>>, vector<128x128xf32>,
      %cst_29 = arith.constant 0.000000e+00 : f32
      %38 = vector.broadcast %cst_29 : f32 to vector<128x128xf32>
      %c0_30 = arith.constant 0 : index
      %c0_31 = arith.constant 0 : index
      %39 = vector.load %arg9[%c0_30, %c0_31] : memref<128x128xf32, #tpu.memory_space<vmem>>, vector<128x128xf32>
      tpu.vector_store %arg9[%c0_30, %c0_31], %38 {strides = array<i32>} : memref<128x128xf32, #tpu.memory_space<vmem>>, vector<128x128xf32>,
    } else {
    }
    %c0 = arith.constant 0 : index
    %c0_1 = arith.constant 0 : index
    %3 = vector.load %arg3[%c0, %c0_1] : memref<128x128xbf16, #tpu.memory_space<vmem>>, vector<128x128xbf16>
    %c0_2 = arith.constant 0 : index
    %c0_3 = arith.constant 0 : index
    %4 = vector.load %arg4[%c0_2, %c0_3] : memref<128x128xbf16, #tpu.memory_space<vmem>>, vector<128x128xbf16>
    %cst = arith.constant dense<0.000000e+00> : vector<128x128xf32>
    %5 = tpu.matmul %3, %4, %cst {dimension_numbers = #tpu.dot_dimension_numbers<[1], [1], [0], [0], [0, 0, 1, 0], [], []>} : vector<128x128xbf16>, vector<128x128xbf16>, vector<128x128xf32> -> vector<128x128xf32>
    %c0_4 = arith.constant 0 : index
    %c0_5 = arith.constant 0 : index
    %6 = vector.load %arg7[%c0_4, %c0_5] : memref<128x128xf32, #tpu.memory_space<vmem>>, vector<128x128xf32>
    %cst_6 = arith.constant dense<0xFF800000> : vector<128xf32>
    %7 = vector.multi_reduction <maximumf>, %5, %cst_6 [1] : vector<128x128xf32> to vector<128xf32>
    %8 = vector.shape_cast %7 : vector<128xf32> to vector<128x1xf32>
    %9 = vector.broadcast %8 : vector<128x1xf32> to vector<128x128xf32>
    %10 = arith.maximumf %6, %9 : vector<128x128xf32>
    %11 = arith.subf %6, %10 : vector<128x128xf32>
    %12 = math.exp %11 : vector<128x128xf32>
    %13 = arith.subf %5, %10 : vector<128x128xf32>
    %14 = arith.truncf %13 : vector<128x128xf32> to vector<128x128xbf16>
    %15 = math.exp %14 : vector<128x128xbf16>
    %16 = arith.extf %15 : vector<128x128xbf16> to vector<128x128xf32>
    %c0_7 = arith.constant 0 : index
    %c0_8 = arith.constant 0 : index
    %17 = vector.load %arg8[%c0_7, %c0_8] : memref<128x128xf32, #tpu.memory_space<vmem>>, vector<128x128xf32>
    %18 = arith.mulf %12, %17 : vector<128x128xf32>
    %cst_9 = arith.constant dense<0.000000e+00> : vector<128xf32>
    %19 = vector.multi_reduction <add>, %16, %cst_9 [1] : vector<128x128xf32> to vector<128xf32>
    %20 = vector.shape_cast %19 : vector<128xf32> to vector<128x1xf32>
    %21 = vector.broadcast %20 : vector<128x1xf32> to vector<128x128xf32>
    %22 = arith.addf %18, %21 : vector<128x128xf32>
    %c0_10 = arith.constant 0 : index
    %c0_11 = arith.constant 0 : index
    %23 = vector.load %arg8[%c0_10, %c0_11] : memref<128x128xf32, #tpu.memory_space<vmem>>, vector<128x128xf32>
    tpu.vector_store %arg8[%c0_10, %c0_11], %22 {strides = array<i32>} : memref<128x128xf32, #tpu.memory_space<vmem>>, vector<128x128xf32>,
    %c0_12 = arith.constant 0 : index
    %c0_13 = arith.constant 0 : index
    %24 = vector.load %arg9[%c0_12, %c0_13] : memref<128x128xf32, #tpu.memory_space<vmem>>, vector<128x128xf32>
    %25 = arith.mulf %12, %24 : vector<128x128xf32>
    %c0_14 = arith.constant 0 : index
    %c0_15 = arith.constant 0 : index
    %26 = vector.load %arg5[%c0_14, %c0_15] : memref<128x128xbf16, #tpu.memory_space<vmem>>, vector<128x128xbf16>
    %cst_16 = arith.constant dense<0.000000e+00> : vector<128x128xf32>
    %27 = tpu.matmul %15, %26, %cst_16 {dimension_numbers = #tpu.dot_dimension_numbers<[1], [0], [0], [1], [0, 0, 1, 1], [], []>} : vector<128x128xbf16>, vector<128x128xbf16>, vector<128x128xf32> -> vector<128x128xf32>
    %28 = arith.addf %25, %27 : vector<128x128xf32>
    %c0_17 = arith.constant 0 : index
    %c0_18 = arith.constant 0 : index
    %29 = vector.load %arg9[%c0_17, %c0_18] : memref<128x128xf32, #tpu.memory_space<vmem>>, vector<128x128xf32>
    tpu.vector_store %arg9[%c0_17, %c0_18], %28 {strides = array<i32>} : memref<128x128xf32, #tpu.memory_space<vmem>>, vector<128x128xf32>,
    %c0_19 = arith.constant 0 : index
    %c0_20 = arith.constant 0 : index
    %30 = vector.load %arg7[%c0_19, %c0_20] : memref<128x128xf32, #tpu.memory_space<vmem>>, vector<128x128xf32>
    tpu.vector_store %arg7[%c0_19, %c0_20], %10 {strides = array<i32>} : memref<128x128xf32, #tpu.memory_space<vmem>>, vector<128x128xf32>,
    %c0_i32_21 = arith.constant 0 : i32
    %31 = arith.cmpi eq, %arg2, %c0_i32_21 : i32
    %32 = arith.extui %31 : i1 to i32
    %c0_i32_22 = arith.constant 0 : i32
    %33 = arith.cmpi ne, %32, %c0_i32_22 : i32
    scf.if %33 {
      %c0_23 = arith.constant 0 : index
      %c0_24 = arith.constant 0 : index
      %34 = vector.load %arg8[%c0_23, %c0_24] : memref<128x128xf32, #tpu.memory_space<vmem>>, vector<128x128xf32>
      %35 = tpu.reciprocal %34 {approx = true} : vector<128x128xf32> -> vector<128x128xf32>
      %c0_25 = arith.constant 0 : index
      %c0_26 = arith.constant 0 : index
      %36 = vector.load %arg9[%c0_25, %c0_26] : memref<128x128xf32, #tpu.memory_space<vmem>>, vector<128x128xf32>
      %37 = arith.mulf %36, %35 : vector<128x128xf32>
      %c0_27 = arith.constant 0 : index
      %c0_28 = arith.constant 0 : index
      %38 = vector.load %arg6[%c0_27, %c0_28] : memref<128x128xf32, #tpu.memory_space<vmem>>, vector<128x128xf32>
      tpu.vector_store %arg6[%c0_27, %c0_28], %37 {strides = array<i32>} : memref<128x128xf32, #tpu.memory_space<vmem>>, vector<128x128xf32>,
    } else {
    }
    return
  }
  func.func @transform_0(%arg0: i32, %arg1: i32, %arg2: i32) -> (i32, i32) {
    %c0_i32 = arith.constant 0 : i32
    return %arg1, %arg0 : i32, i32
  }
  func.func @transform_1(%arg0: i32, %arg1: i32, %arg2: i32) -> (i32, i32) {
    %c0_i32 = arith.constant 0 : i32
    return %arg2, %arg0 : i32, i32
  }
  func.func @transform_2(%arg0: i32, %arg1: i32, %arg2: i32) -> (i32, i32) {
    %c0_i32 = arith.constant 0 : i32
    return %arg2, %arg0 : i32, i32
  }
  func.func @transform_3(%arg0: i32, %arg1: i32, %arg2: i32) -> (i32, i32) {
    %c0_i32 = arith.constant 0 : i32
    return %arg1, %arg0 : i32, i32
  }
}

</mosaic_0001>

<llo_original>
// kernel: tpu_custom_call.1
$region0: #{tpu_custom_call.1}
  #allocation0 [shape = 'u32[]', space=smem, size = 0x4, offset = 0x4, fixed_abs, tag = 'smem constant byte address 0x4 - core index']
  #allocation1 [shape = 'u32[144,128]{1,0:T(1,128)}', space=vmem, size = 0x12000, scoped, tag = 'internal scratch']
  #allocation2 [shape = 'f32[128,128]{1,0:T(8,128)}', space=vmem, size = 0x10000, scoped, tag = 'scratch operand']
  #allocation3 [shape = 'f32[128,128]{1,0:T(8,128)}', space=vmem, size = 0x10000, scoped, tag = 'scratch operand']
  #allocation4 [shape = 'f32[128,128]{1,0:T(8,128)}', space=vmem, size = 0x10000, scoped, tag = 'scratch operand']
  %s0 = inlined_call_operand.hbm [shape: bf16[128,512], index: 0, kind: input, shape index: {}]
  %s1 = inlined_call_operand.hbm [shape: bf16[128,512], index: 1, kind: input, shape index: {}]
  %s2 = inlined_call_operand.hbm [shape: bf16[128,512], index: 2, kind: input, shape index: {}]
  %s3 = inlined_call_operand.hbm [shape: f32[128,512], index: 3, kind: output, shape index: {}]
  %s4 = sld [smem:[#allocation0]]
  $region65: #{tpu_custom_call.1} parent=0
    _
  %s6 = ssub.s32 1, %s4
  %s7 = scalar_select 0, %s6, %s4
  $region1: #{tpu_custom_call.1} parent=0
    #allocation5 [shape = 'u8[65536]{0}', space=vmem, size = 0x10000, scoped, tag = 'input window, operand 0']
    #allocation6 [shape = 's32[2]{0}', space=sflag, size = 0x8, scoped, tag = 'scoped memory for tpu_custom_call.1']
    #allocation7 [shape = 's32[2]{0}', space=sflag, size = 0x8, scoped, tag = 'scoped memory for tpu_custom_call.1']
    #allocation8 [shape = 'u8[65536]{0}', space=vmem, size = 0x10000, scoped, tag = 'input window, operand 1']
    #allocation9 [shape = 's32[2]{0}', space=sflag, size = 0x8, scoped, tag = 'scoped memory for tpu_custom_call.1']
    #allocation10 [shape = 'u8[65536]{0}', space=vmem, size = 0x10000, scoped, tag = 'input window, operand 2']
    #allocation11 [shape = 'u8[131072]{0}', space=vmem, size = 0x20000, scoped, tag = 'output window, operand 0']
    %8 = vsyncpa [#allocation6], 0
    %s9 = scalar_lea.sflag [#allocation6], 1
    %10 = vsyncpa %s9, 0
    %11 = vsyncpa [#allocation9], 0
    %s12 = scalar_lea.sflag [#allocation9], 1
    %13 = vsyncpa %s12, 0
    %14 = vsyncpa [#allocation7], 0
    %s15 = scalar_lea.sflag [#allocation7], 1
    %16 = vsyncpa %s15, 0
    loop: start=0, step=1, limit=6
    $region2: #{tpu_custom_call.1} parent=1 // loop_pre_header
      _
    $region3: #{tpu_custom_call.1} parent=1 // loop_header
      %s18 = sphi 0, %s22
      %p19 = scmp.ge.s32.totalorder %s18, 6
      %s25 = sphi 0, %s44
      %s26 = sphi 0, %s40
      %s27 = sphi 0, %s36
      %s28 = sphi 0, %s25
      %s29 = sphi 0, %s26
      %s30 = sphi 0, %s27
      %s31 = sphi 0, %s28
      %s32 = sphi 0, %s29
      %s33 = sphi 0, %s30
      %s49 = sphi 0, %s51
      %s52 = sphi 0, %s49
      %s53 = sphi 0, %s52
      %s69 = sphi 0, %s53
      %s77 = sphi 0, %s79
      %s80 = sphi 0, %s77
      %s81 = sphi 0, %s80
      %s97 = sphi 0, %s81
      %s105 = sphi 0, %s107
      %s108 = sphi 0, %s105
      %s109 = sphi 0, %s108
      %s125 = sphi 0, %s109
      %s133 = sphi 0, %s135
      %s136 = sphi 0, %s133
      %s137 = sphi 0, %s136
      %s153 = sphi 0, %s137
    $region4: #{tpu_custom_call.1} parent=1 // loop_header_branch
      %21 = sbr.rel (%p19) target = $region8
    $region5: #{tpu_custom_call.1} parent=1 // loop_body
      %s23 = ssub.s32 %s18, 1
      %s24 = ssub.s32 %s18, 2
      %s34 = sadd.s32 1, %s27
      %p35 = scmp.ge.s32.totalorder %s34, 1
      %s36 = scalar_select %p35, 0, %s34
      %s37 = sadd.s32 1, %s26
      %s38 = scalar_select %p35, %s37, %s26
      %p39 = scmp.ge.s32.totalorder %s38, 1
      %s40 = scalar_select %p39, 0, %s38
      %s41 = sadd.s32 1, %s25
      %s42 = scalar_select %p39, %s41, %s25
      %p43 = scmp.ge.s32.totalorder %s42, 4
      %s44 = scalar_select %p43, 0, %s42
      %s45 = ssub.s32 %s26, %s40
      %s46 = ssub.s32 %s25, %s44
      %s47 = sor.u32 %s45, %s46
      %p48 = scmp.eq.s32.totalorder %s47, 0
      %s50 = sadd.s32 %s49, 1
      %s51 = scalar_select %p48, %s49, %s50
      %p54 = pneg %p48
      %p55 = scmp.eq.s32.totalorder %s18, 3
      %p56 = por %p54, %p55
      %p57 = scmp.ne.s32.totalorder %s49, %s52
      %p58 = scmp.eq.s32.totalorder %s18, 0
      %p59 = por %p57, %p58
      %p60 = scmp.ne.s32.totalorder %s49, %s52
      %p61 = scmp.eq.s32.totalorder %s23, 3
      %p62 = por %p60, %p61
      %p63 = scmp.ne.s32.totalorder %s52, %s53
      %p64 = scmp.eq.s32.totalorder %s23, 0
      %p65 = por %p63, %p64
      %p66 = scmp.ne.s32.totalorder %s52, %s53
      %p67 = scmp.eq.s32.totalorder %s24, 3
      %p68 = por %p66, %p67
      %p70 = scmp.ne.s32.totalorder %s53, %s69
      %p71 = scmp.eq.s32.totalorder %s24, 0
      %p72 = por %p70, %p71
      %s73 = ssub.s32 %s27, %s36
      %s74 = ssub.s32 %s25, %s44
      %s75 = sor.u32 %s73, %s74
      %p76 = scmp.eq.s32.totalorder %s75, 0
      %s78 = sadd.s32 %s77, 1
      %s79 = scalar_select %p76, %s77, %s78
      %p82 = pneg %p76
      %p83 = scmp.eq.s32.totalorder %s18, 3
      %p84 = por %p82, %p83
      %p85 = scmp.ne.s32.totalorder %s77, %s80
      %p86 = scmp.eq.s32.totalorder %s18, 0
      %p87 = por %p85, %p86
      %p88 = scmp.ne.s32.totalorder %s77, %s80
      %p89 = scmp.eq.s32.totalorder %s23, 3
      %p90 = por %p88, %p89
      %p91 = scmp.ne.s32.totalorder %s80, %s81
      %p92 = scmp.eq.s32.totalorder %s23, 0
      %p93 = por %p91, %p92
      %p94 = scmp.ne.s32.totalorder %s80, %s81
      %p95 = scmp.eq.s32.totalorder %s24, 3
      %p96 = por %p94, %p95
      %p98 = scmp.ne.s32.totalorder %s81, %s97
      %p99 = scmp.eq.s32.totalorder %s24, 0
      %p100 = por %p98, %p99
      %s101 = ssub.s32 %s27, %s36
      %s102 = ssub.s32 %s25, %s44
      %s103 = sor.u32 %s101, %s102
      %p104 = scmp.eq.s32.totalorder %s103, 0
      %s106 = sadd.s32 %s105, 1
      %s107 = scalar_select %p104, %s105, %s106
      %p110 = pneg %p104
      %p111 = scmp.eq.s32.totalorder %s18, 3
      %p112 = por %p110, %p111
      %p113 = scmp.ne.s32.totalorder %s105, %s108
      %p114 = scmp.eq.s32.totalorder %s18, 0
      %p115 = por %p113, %p114
      %p116 = scmp.ne.s32.totalorder %s105, %s108
      %p117 = scmp.eq.s32.totalorder %s23, 3
      %p118 = por %p116, %p117
      %p119 = scmp.ne.s32.totalorder %s108, %s109
      %p120 = scmp.eq.s32.totalorder %s23, 0
      %p121 = por %p119, %p120
      %p122 = scmp.ne.s32.totalorder %s108, %s109
      %p123 = scmp.eq.s32.totalorder %s24, 3
      %p124 = por %p122, %p123
      %p126 = scmp.ne.s32.totalorder %s109, %s125
      %p127 = scmp.eq.s32.totalorder %s24, 0
      %p128 = por %p126, %p127
      %s129 = ssub.s32 %s26, %s40
      %s130 = ssub.s32 %s25, %s44
      %s131 = sor.u32 %s129, %s130
      %p132 = scmp.eq.s32.totalorder %s131, 0
      %s134 = sadd.s32 %s133, 1
      %s135 = scalar_select %p132, %s133, %s134
      %p138 = pneg %p132
      %p139 = scmp.eq.s32.totalorder %s18, 3
      %p140 = por %p138, %p139
      %p141 = scmp.ne.s32.totalorder %s133, %s136
      %p142 = scmp.eq.s32.totalorder %s18, 0
      %p143 = por %p141, %p142
      %p144 = scmp.ne.s32.totalorder %s133, %s136
      %p145 = scmp.eq.s32.totalorder %s23, 3
      %p146 = por %p144, %p145
      %p147 = scmp.ne.s32.totalorder %s136, %s137
      %p148 = scmp.eq.s32.totalorder %s23, 0
      %p149 = por %p147, %p148
      %p150 = scmp.ne.s32.totalorder %s136, %s137
      %p151 = scmp.eq.s32.totalorder %s24, 3
      %p152 = por %p150, %p151
      %p154 = scmp.ne.s32.totalorder %s137, %s153
      %p155 = scmp.eq.s32.totalorder %s24, 0
      %p156 = por %p154, %p155
      %p157 = scmp.le.s32.totalorder 1, %s18
      %p158 = scmp.lt.s32.totalorder %s18, 5
      %p159 = pnand %p157, %p158
      %p160 = pneg %p159
      // Predicated region
      $region9: #{tpu_custom_call.1} parent=5 // pred_check
        _
      $region10: #{tpu_custom_call.1} parent=5 // pred_check_branch
        %162 = sbr.rel (%p159) target = $region12
      $region11: #{tpu_custom_call.1} parent=5 // pred_region
        %s163 = ssub.s32 %s18, 1
      $region12: #{tpu_custom_call.1} parent=5 // pred_fallthru
        _
      %p164 = scmp.lt.s32.totalorder %s18, 4
      // Predicated region
      $region13: #{tpu_custom_call.1} parent=5 // pred_check
        %p165 = pneg %p164
      $region14: #{tpu_custom_call.1} parent=5 // pred_check_branch
        %167 = sbr.rel (%p165) target = $region16
      $region15: #{tpu_custom_call.1} parent=5 // pred_region
        // Predicated region
        $region17: #{tpu_custom_call.1} parent=15 // pred_check
          %p168 = pneg %p59
        $region18: #{tpu_custom_call.1} parent=15 // pred_check_branch
          %170 = sbr.rel (%p168) target = $region20
        $region19: #{tpu_custom_call.1} parent=15 // pred_region
          %s171 = sand.u32 %s49, 1
          %s172 = scalar_lea.sflag [#allocation6], %s171
          %s173 = sand.u32 %s49, 1
          %s174 = smul.addr %s173, 64
          %s175 = scalar_lea.vmem [#allocation5], %s174
          %s176 = smul.u32 16, %s26
          %s178 = ssub.s32 1024, 1024
          %179 = vsyncadd %s172, %s178
          %s180 = smul.addr %s176, 4
          %s181 = sadd.s32 %s25, %s180
          %s182 = smul.addr %s181, 64
          %s183 = scalar_lea.hbm %s0, %s182
          %s184 = sshll.u32 %s175, 4
          %s185 = int_to_ptr.vmem [resolvable:$true] %s184
          %190 = dma.hbm_to_vmem [thread:$0]  %s183, 1024, %s185, %s172, 256, 64, 4
        $region20: #{tpu_custom_call.1} parent=15 // pred_fallthru
          _
        // Predicated region
        $region21: #{tpu_custom_call.1} parent=15 // pred_check
          %p191 = pneg %p87
        $region22: #{tpu_custom_call.1} parent=15 // pred_check_branch
          %193 = sbr.rel (%p191) target = $region24
        $region23: #{tpu_custom_call.1} parent=15 // pred_region
          %s194 = sand.u32 %s18, 1
          %s195 = scalar_lea.sflag [#allocation9], %s194
          %s196 = sand.u32 %s77, 1
          %s197 = smul.addr %s196, 64
          %s198 = scalar_lea.vmem [#allocation8], %s197
          %s199 = smul.u32 16, %s27
          %s201 = ssub.s32 1024, 1024
          %202 = vsyncadd %s195, %s201
          %s203 = smul.addr %s199, 4
          %s204 = sadd.s32 %s25, %s203
          %s205 = smul.addr %s204, 64
          %s206 = scalar_lea.hbm %s1, %s205
          %s207 = sshll.u32 %s198, 4
          %s208 = int_to_ptr.vmem [resolvable:$true] %s207
          %213 = dma.hbm_to_vmem [thread:$0]  %s206, 1024, %s208, %s195, 256, 64, 4
        $region24: #{tpu_custom_call.1} parent=15 // pred_fallthru
          _
        // Predicated region
        $region25: #{tpu_custom_call.1} parent=15 // pred_check
          %p214 = pneg %p115
        $region26: #{tpu_custom_call.1} parent=15 // pred_check_branch
          %216 = sbr.rel (%p214) target = $region28
        $region27: #{tpu_custom_call.1} parent=15 // pred_region
          %s217 = sand.u32 %s18, 1
          %s218 = scalar_lea.sflag [#allocation9], %s217
          %s219 = sand.u32 %s105, 1
          %s220 = smul.addr %s219, 64
          %s221 = scalar_lea.vmem [#allocation10], %s220
          %s222 = smul.u32 16, %s27
          %s224 = ssub.s32 1024, 1024
          %225 = vsyncadd %s218, %s224
          %s226 = smul.addr %s222, 4
          %s227 = sadd.s32 %s25, %s226
          %s228 = smul.addr %s227, 64
          %s229 = scalar_lea.hbm %s2, %s228
          %s230 = sshll.u32 %s221, 4
          %s231 = int_to_ptr.vmem [resolvable:$true] %s230
          %236 = dma.hbm_to_vmem [thread:$0]  %s229, 1024, %s231, %s218, 256, 64, 4
        $region28: #{tpu_custom_call.1} parent=15 // pred_fallthru
          _
      $region16: #{tpu_custom_call.1} parent=5 // pred_fallthru
        _
      %p237 = scmp.le.s32.totalorder 1, %s18
      %p238 = scmp.lt.s32.totalorder %s18, 5
      %p239 = pnand %p237, %p238
      %p240 = pneg %p239
      // Predicated region
      $region29: #{tpu_custom_call.1} parent=5 // pred_check
        _
      $region30: #{tpu_custom_call.1} parent=5 // pred_check_branch
        %242 = sbr.rel (%p239) target = $region32
      $region31: #{tpu_custom_call.1} parent=5 // pred_region
        %s243 = ssub.s32 %s18, 1
        %s244 = sand.u32 %s52, 1
        %s245 = scalar_lea.sflag [#allocation6], %s244
        %s246 = sand.u32 %s52, 1
        %s247 = smul.addr %s246, 64
        %s248 = scalar_lea.vmem [#allocation5], %s247
        // Predicated region
        $region33: #{tpu_custom_call.1} parent=31 // pred_check
          %p249 = pneg %p65
        $region34: #{tpu_custom_call.1} parent=31 // pred_check_branch
          %251 = sbr.rel (%p249) target = $region36
        $region35: #{tpu_custom_call.1} parent=31 // pred_region
          %252 = dma.done %s245, 1024
        $region36: #{tpu_custom_call.1} parent=31 // pred_fallthru
          _
        %s253 = sand.u32 %s23, 1
        %s254 = scalar_lea.sflag [#allocation9], %s253
        %s255 = sand.u32 %s80, 1
        %s256 = smul.addr %s255, 64
        %s257 = scalar_lea.vmem [#allocation8], %s256
        // Predicated region
        $region37: #{tpu_custom_call.1} parent=31 // pred_check
          %p258 = pneg %p93
        $region38: #{tpu_custom_call.1} parent=31 // pred_check_branch
          %260 = sbr.rel (%p258) target = $region40
        $region39: #{tpu_custom_call.1} parent=31 // pred_region
          %261 = dma.done %s254, 1024
        $region40: #{tpu_custom_call.1} parent=31 // pred_fallthru
          _
        %s262 = sand.u32 %s23, 1
        %s263 = scalar_lea.sflag [#allocation9], %s262
        %s264 = sand.u32 %s108, 1
        %s265 = smul.addr %s264, 64
        %s266 = scalar_lea.vmem [#allocation10], %s265
        // Predicated region
        $region41: #{tpu_custom_call.1} parent=31 // pred_check
          %p267 = pneg %p121
        $region42: #{tpu_custom_call.1} parent=31 // pred_check_branch
          %269 = sbr.rel (%p267) target = $region44
        $region43: #{tpu_custom_call.1} parent=31 // pred_region
          %270 = dma.done %s263, 1024
        $region44: #{tpu_custom_call.1} parent=31 // pred_fallthru
          _
        %s271 = sand.u32 %s52, 1
        %s272 = scalar_lea.sflag [#allocation6], %s271
        %s273 = sand.u32 %s52, 1
        %s274 = smul.addr %s273, 64
        %s275 = scalar_lea.vmem [#allocation5], %s274
        %p276 = pneg %p65
        %p277 = pneg %p62
        %s278 = sand.u32 %s23, 1
        %s279 = scalar_lea.sflag [#allocation9], %s278
        %s280 = sand.u32 %s80, 1
        %s281 = smul.addr %s280, 64
        %s282 = scalar_lea.vmem [#allocation8], %s281
        %p283 = pneg %p93
        %p284 = pneg %p90
        %s285 = sand.u32 %s23, 1
        %s286 = scalar_lea.sflag [#allocation9], %s285
        %s287 = sand.u32 %s108, 1
        %s288 = smul.addr %s287, 64
        %s289 = scalar_lea.vmem [#allocation10], %s288
        %p290 = pneg %p121
        %p291 = pneg %p118
        %p292 = pneg %p149
        %p293 = pneg %p146
        %s294 = sand.u32 %s136, 1
        %s295 = scalar_lea.sflag [#allocation7], %s294
        %s296 = sand.u32 %s136, 1
        %s297 = smul.addr %s296, 128
        %s298 = scalar_lea.vmem [#allocation11], %s297
        %s299 = smul.u32 16, %s29
        %s300 = smul.u32 16, %s30
        %s301 = smul.u32 16, %s30
        %s302 = smul.u32 16, %s29
        %p304 = scmp.eq.s32.totalorder %s30, 0
        // Predicated region
        $region45: #{tpu_custom_call.1} parent=31 // pred_check
          %p305 = pneg %p304
        $region46: #{tpu_custom_call.1} parent=31 // pred_check_branch
          %307 = sbr.rel (%p305) target = $region48
        $region47: #{tpu_custom_call.1} parent=31 // pred_region
          %308 = vst [vmem:[#allocation2] sm:$0xff] -inf
          %309 = vst [vmem:[#allocation2 + $0x8] sm:$0xff] -inf
          %310 = vst [vmem:[#allocation2 + $0x10] sm:$0xff] -inf
          %311 = vst [vmem:[#allocation2 + $0x18] sm:$0xff] -inf
          %312 = vst [vmem:[#allocation2 + $0x20] sm:$0xff] -inf
          %313 = vst [vmem:[#allocation2 + $0x28] sm:$0xff] -inf
          %314 = vst [vmem:[#allocation2 + $0x30] sm:$0xff] -inf
          %315 = vst [vmem:[#allocation2 + $0x38] sm:$0xff] -inf
          %316 = vst [vmem:[#allocation2 + $0x40] sm:$0xff] -inf
          %317 = vst [vmem:[#allocation2 + $0x48] sm:$0xff] -inf
          %318 = vst [vmem:[#allocation2 + $0x50] sm:$0xff] -inf
          %319 = vst [vmem:[#allocation2 + $0x58] sm:$0xff] -inf
          %320 = vst [vmem:[#allocation2 + $0x60] sm:$0xff] -inf
          %321 = vst [vmem:[#allocation2 + $0x68] sm:$0xff] -inf
          %322 = vst [vmem:[#allocation2 + $0x70] sm:$0xff] -inf
          %323 = vst [vmem:[#allocation2 + $0x78] sm:$0xff] -inf
          %324 = vst [vmem:[#allocation3] sm:$0xff] 0.0
          %325 = vst [vmem:[#allocation3 + $0x8] sm:$0xff] 0.0
          %326 = vst [vmem:[#allocation3 + $0x10] sm:$0xff] 0.0
          %327 = vst [vmem:[#allocation3 + $0x18] sm:$0xff] 0.0
          %328 = vst [vmem:[#allocation3 + $0x20] sm:$0xff] 0.0
          %329 = vst [vmem:[#allocation3 + $0x28] sm:$0xff] 0.0
          %330 = vst [vmem:[#allocation3 + $0x30] sm:$0xff] 0.0
          %331 = vst [vmem:[#allocation3 + $0x38] sm:$0xff] 0.0
          %332 = vst [vmem:[#allocation3 + $0x40] sm:$0xff] 0.0
          %333 = vst [vmem:[#allocation3 + $0x48] sm:$0xff] 0.0
          %334 = vst [vmem:[#allocation3 + $0x50] sm:$0xff] 0.0
          %335 = vst [vmem:[#allocation3 + $0x58] sm:$0xff] 0.0
          %336 = vst [vmem:[#allocation3 + $0x60] sm:$0xff] 0.0
          %337 = vst [vmem:[#allocation3 + $0x68] sm:$0xff] 0.0
          %338 = vst [vmem:[#allocation3 + $0x70] sm:$0xff] 0.0
          %339 = vst [vmem:[#allocation3 + $0x78] sm:$0xff] 0.0
          %340 = vst [vmem:[#allocation4] sm:$0xff] 0.0
          %341 = vst [vmem:[#allocation4 + $0x8] sm:$0xff] 0.0
          %342 = vst [vmem:[#allocation4 + $0x10] sm:$0xff] 0.0
          %343 = vst [vmem:[#allocation4 + $0x18] sm:$0xff] 0.0
          %344 = vst [vmem:[#allocation4 + $0x20] sm:$0xff] 0.0
          %345 = vst [vmem:[#allocation4 + $0x28] sm:$0xff] 0.0
          %346 = vst [vmem:[#allocation4 + $0x30] sm:$0xff] 0.0
          %347 = vst [vmem:[#allocation4 + $0x38] sm:$0xff] 0.0
          %348 = vst [vmem:[#allocation4 + $0x40] sm:$0xff] 0.0
          %349 = vst [vmem:[#allocation4 + $0x48] sm:$0xff] 0.0
          %350 = vst [vmem:[#allocation4 + $0x50] sm:$0xff] 0.0
          %351 = vst [vmem:[#allocation4 + $0x58] sm:$0xff] 0.0
          %352 = vst [vmem:[#allocation4 + $0x60] sm:$0xff] 0.0
          %353 = vst [vmem:[#allocation4 + $0x68] sm:$0xff] 0.0
          %354 = vst [vmem:[#allocation4 + $0x70] sm:$0xff] 0.0
          %355 = vst [vmem:[#allocation4 + $0x78] sm:$0xff] 0.0
        $region48: #{tpu_custom_call.1} parent=31 // pred_fallthru
          _
        %v356 = vld [vmem:[%s248] sm:$0xf]
        %v357 = vld [vmem:[%s248 + $0x4] sm:$0xf]
        %v358 = vld [vmem:[%s248 + $0x8] sm:$0xf]
        %v359 = vld [vmem:[%s248 + $0xc] sm:$0xf]
        %v360 = vld [vmem:[%s248 + $0x10] sm:$0xf]
        %v361 = vld [vmem:[%s248 + $0x14] sm:$0xf]
        %v362 = vld [vmem:[%s248 + $0x18] sm:$0xf]
        %v363 = vld [vmem:[%s248 + $0x1c] sm:$0xf]
        %v364 = vld [vmem:[%s248 + $0x20] sm:$0xf]
        %v365 = vld [vmem:[%s248 + $0x24] sm:$0xf]
        %v366 = vld [vmem:[%s248 + $0x28] sm:$0xf]
        %v367 = vld [vmem:[%s248 + $0x2c] sm:$0xf]
        %v368 = vld [vmem:[%s248 + $0x30] sm:$0xf]
        %v369 = vld [vmem:[%s248 + $0x34] sm:$0xf]
        %v370 = vld [vmem:[%s248 + $0x38] sm:$0xf]
        %v371 = vld [vmem:[%s248 + $0x3c] sm:$0xf]
        %v372 = vld [vmem:[%s257] sm:$0xf]
        %v373 = vld [vmem:[%s257 + $0x4] sm:$0xf]
        %v374 = vld [vmem:[%s257 + $0x8] sm:$0xf]
        %v375 = vld [vmem:[%s257 + $0xc] sm:$0xf]
        %v376 = vld [vmem:[%s257 + $0x10] sm:$0xf]
        %v377 = vld [vmem:[%s257 + $0x14] sm:$0xf]
        %v378 = vld [vmem:[%s257 + $0x18] sm:$0xf]
        %v379 = vld [vmem:[%s257 + $0x1c] sm:$0xf]
        %v380 = vld [vmem:[%s257 + $0x20] sm:$0xf]
        %v381 = vld [vmem:[%s257 + $0x24] sm:$0xf]
        %v382 = vld [vmem:[%s257 + $0x28] sm:$0xf]
        %v383 = vld [vmem:[%s257 + $0x2c] sm:$0xf]
        %v384 = vld [vmem:[%s257 + $0x30] sm:$0xf]
        %v385 = vld [vmem:[%s257 + $0x34] sm:$0xf]
        %v386 = vld [vmem:[%s257 + $0x38] sm:$0xf]
        %v387 = vld [vmem:[%s257 + $0x3c] sm:$0xf]
        %v404 = vunpack.c.l.b16 %v356
        %v405 = vunpack.c.l.b16 %v357
        %v406 = vunpack.c.l.b16 %v358
        %v407 = vunpack.c.l.b16 %v359
        %v408 = vunpack.c.l.b16 %v360
        %v409 = vunpack.c.l.b16 %v361
        %v410 = vunpack.c.l.b16 %v362
        %v411 = vunpack.c.l.b16 %v363
        %v412 = vunpack.c.l.b16 %v364
        %v413 = vunpack.c.l.b16 %v365
        %v414 = vunpack.c.l.b16 %v366
        %v415 = vunpack.c.l.b16 %v367
        %v416 = vunpack.c.l.b16 %v368
        %v417 = vunpack.c.l.b16 %v369
        %v418 = vunpack.c.l.b16 %v370
        %v419 = vunpack.c.l.b16 %v371
        %v420 = vpack.c.b16 %v405, %v404
        %v421 = vpack.c.b16 %v407, %v406
        %v422 = vpack.c.b16 %v409, %v408
        %v423 = vpack.c.b16 %v411, %v410
        %v424 = vpack.c.b16 %v413, %v412
        %v425 = vpack.c.b16 %v415, %v414
        %v426 = vpack.c.b16 %v417, %v416
        %v427 = vpack.c.b16 %v419, %v418
        %v452 = vunpack.c.l.b16 %v372
        %v453 = vunpack.c.l.b16 %v373
        %v454 = vunpack.c.l.b16 %v374
        %v455 = vunpack.c.l.b16 %v375
        %v456 = vunpack.c.l.b16 %v376
        %v457 = vunpack.c.l.b16 %v377
        %v458 = vunpack.c.l.b16 %v378
        %v459 = vunpack.c.l.b16 %v379
        %v460 = vunpack.c.l.b16 %v380
        %v461 = vunpack.c.l.b16 %v381
        %v462 = vunpack.c.l.b16 %v382
        %v463 = vunpack.c.l.b16 %v383
        %v464 = vunpack.c.l.b16 %v384
        %v465 = vunpack.c.l.b16 %v385
        %v466 = vunpack.c.l.b16 %v386
        %v467 = vunpack.c.l.b16 %v387
        %v468 = vpack.c.b16 %v453, %v452
        %v469 = vpack.c.b16 %v455, %v454
        %v470 = vpack.c.b16 %v457, %v456
        %v471 = vpack.c.b16 %v459, %v458
        %v472 = vpack.c.b16 %v461, %v460
        %v473 = vpack.c.b16 %v463, %v462
        %v474 = vpack.c.b16 %v465, %v464
        %v475 = vpack.c.b16 %v467, %v466
        %484 = vmatprep.subr.bf16.mxu0 0
        %485 = vmatpush1.bf16.xpose.msra.mxu0 %v475
        %486 = vmatprep.subr.bf16.mxu0 0
        %487 = vmatpush1.bf16.xpose.msra.mxu0 %v474
        %488 = vmatprep.subr.bf16.mxu0 0
        %489 = vmatpush1.bf16.xpose.msra.mxu0 %v473
        %490 = vmatprep.subr.bf16.mxu0 0
        %491 = vmatpush1.bf16.xpose.msra.mxu0 %v472
        %492 = vmatprep.subr.bf16.mxu0 0
        %493 = vmatpush1.bf16.xpose.msra.mxu0 %v471
        %494 = vmatprep.subr.bf16.mxu0 0
        %495 = vmatpush1.bf16.xpose.msra.mxu0 %v470
        %496 = vmatprep.subr.bf16.mxu0 0
        %497 = vmatpush1.bf16.xpose.msra.mxu0 %v469
        %498 = vmatprep.subr.bf16.mxu0 0
        %499 = vmatpush1.bf16.xpose.msra.mxu0 %v468
        %500 = vmatprep.subr.bf16.mxu0 0
        %501 = vmatpush2.bf16.xpose.msra.mxu0 0
        %502 = vmatprep.subr.bf16.mxu0 0
        %503 = vmatpush2.bf16.xpose.msra.mxu0 0
        %504 = vmatprep.subr.bf16.mxu0 0
        %505 = vmatpush2.bf16.xpose.msra.mxu0 0
        %506 = vmatprep.subr.bf16.mxu0 0
        %507 = vmatpush2.bf16.xpose.msra.mxu0 0
        %508 = vmatprep.subr.bf16.mxu0 0
        %509 = vmatpush2.bf16.xpose.msra.mxu0 0
        %510 = vmatprep.subr.bf16.mxu0 0
        %511 = vmatpush2.bf16.xpose.msra.mxu0 0
        %512 = vmatprep.subr.bf16.mxu0 0
        %513 = vmatpush2.bf16.xpose.msra.mxu0 0
        %514 = vmatprep.subr.bf16.mxu0 0
        %515 = vmatpush2.bf16.xpose.msra.mxu0 0
        %516 = vmatprep.mubr.bf16.mxu0 0
        %517 = vmatmul.mubr.bf16.gmra.mxu0 %v420
        %v518 = vpop.f32.mrf.mxu0
        %v519 = vadd.f32 0.0, %v518
        %v520 = vpop.f32.mrf.mxu0
        %v521 = vpop.f32.mrf.mxu0
        %v522 = vadd.f32 0.0, %v521
        %v523 = vpop.f32.mrf.mxu0
        %524 = vmatprep.mubr.bf16.mxu0 0
        %525 = vmatmul.mubr.bf16.gmra.mxu0 %v421
        %v526 = vpop.f32.mrf.mxu0
        %v527 = vadd.f32 0.0, %v526
        %v528 = vpop.f32.mrf.mxu0
        %v529 = vpop.f32.mrf.mxu0
        %v530 = vadd.f32 0.0, %v529
        %v531 = vpop.f32.mrf.mxu0
        %532 = vmatprep.mubr.bf16.mxu0 0
        %533 = vmatmul.mubr.bf16.gmra.mxu0 %v422
        %v534 = vpop.f32.mrf.mxu0
        %v535 = vadd.f32 0.0, %v534
        %v536 = vpop.f32.mrf.mxu0
        %v537 = vpop.f32.mrf.mxu0
        %v538 = vadd.f32 0.0, %v537
        %v539 = vpop.f32.mrf.mxu0
        %540 = vmatprep.mubr.bf16.mxu0 0
        %541 = vmatmul.mubr.bf16.gmra.mxu0 %v423
        %v542 = vpop.f32.mrf.mxu0
        %v543 = vadd.f32 0.0, %v542
        %v544 = vpop.f32.mrf.mxu0
        %v545 = vpop.f32.mrf.mxu0
        %v546 = vadd.f32 0.0, %v545
        %v547 = vpop.f32.mrf.mxu0
        %548 = vmatprep.mubr.bf16.mxu0 0
        %549 = vmatmul.mubr.bf16.gmra.mxu0 %v424
        %v550 = vpop.f32.mrf.mxu0
        %v551 = vadd.f32 0.0, %v550
        %v552 = vpop.f32.mrf.mxu0
        %v553 = vpop.f32.mrf.mxu0
        %v554 = vadd.f32 0.0, %v553
        %v555 = vpop.f32.mrf.mxu0
        %556 = vmatprep.mubr.bf16.mxu0 0
        %557 = vmatmul.mubr.bf16.gmra.mxu0 %v425
        %v558 = vpop.f32.mrf.mxu0
        %v559 = vadd.f32 0.0, %v558
        %v560 = vpop.f32.mrf.mxu0
        %v561 = vpop.f32.mrf.mxu0
        %v562 = vadd.f32 0.0, %v561
        %v563 = vpop.f32.mrf.mxu0
        %564 = vmatprep.mubr.bf16.mxu0 0
        %565 = vmatmul.mubr.bf16.gmra.mxu0 %v426
        %v566 = vpop.f32.mrf.mxu0
        %v567 = vadd.f32 0.0, %v566
        %v568 = vpop.f32.mrf.mxu0
        %v569 = vpop.f32.mrf.mxu0
        %v570 = vadd.f32 0.0, %v569
        %v571 = vpop.f32.mrf.mxu0
        %572 = vmatprep.mubr.bf16.mxu0 0
        %573 = vmatmul.mubr.bf16.gmra.mxu0 %v427
        %v574 = vpop.f32.mrf.mxu0
        %v575 = vadd.f32 0.0, %v574
        %v576 = vpop.f32.mrf.mxu0
        %v577 = vpop.f32.mrf.mxu0
        %v578 = vadd.f32 0.0, %v577
        %v579 = vpop.f32.mrf.mxu0
        %580 = vdwg.mxu0
        %v581 = vld [vmem:[#allocation2] sm:$0xff]
        %v582 = vld [vmem:[#allocation2 + $0x8] sm:$0xff]
        %v583 = vld [vmem:[#allocation2 + $0x10] sm:$0xff]
        %v584 = vld [vmem:[#allocation2 + $0x18] sm:$0xff]
        %v585 = vld [vmem:[#allocation2 + $0x20] sm:$0xff]
        %v586 = vld [vmem:[#allocation2 + $0x28] sm:$0xff]
        %v587 = vld [vmem:[#allocation2 + $0x30] sm:$0xff]
        %v588 = vld [vmem:[#allocation2 + $0x38] sm:$0xff]
        %v589 = vld [vmem:[#allocation2 + $0x40] sm:$0xff]
        %v590 = vld [vmem:[#allocation2 + $0x48] sm:$0xff]
        %v591 = vld [vmem:[#allocation2 + $0x50] sm:$0xff]
        %v592 = vld [vmem:[#allocation2 + $0x58] sm:$0xff]
        %v593 = vld [vmem:[#allocation2 + $0x60] sm:$0xff]
        %v594 = vld [vmem:[#allocation2 + $0x68] sm:$0xff]
        %v595 = vld [vmem:[#allocation2 + $0x70] sm:$0xff]
        %v596 = vld [vmem:[#allocation2 + $0x78] sm:$0xff]
        %597 = vmax.xlane.f32.xlu0 %v519
        %v598 = vpop.xlane.xlu0 %597
        %599 = vmax.xlane.f32.xlu0 %v522
        %v600 = vpop.xlane.xlu0 %599
        %601 = vmax.xlane.f32.xlu0 %v527
        %v602 = vpop.xlane.xlu0 %601
        %603 = vmax.xlane.f32.xlu0 %v530
        %v604 = vpop.xlane.xlu0 %603
        %605 = vmax.xlane.f32.xlu0 %v535
        %v606 = vpop.xlane.xlu0 %605
        %607 = vmax.xlane.f32.xlu0 %v538
        %v608 = vpop.xlane.xlu0 %607
        %609 = vmax.xlane.f32.xlu0 %v543
        %v610 = vpop.xlane.xlu0 %609
        %611 = vmax.xlane.f32.xlu0 %v546
        %v612 = vpop.xlane.xlu0 %611
        %613 = vmax.xlane.f32.xlu0 %v551
        %v614 = vpop.xlane.xlu0 %613
        %615 = vmax.xlane.f32.xlu0 %v554
        %v616 = vpop.xlane.xlu0 %615
        %617 = vmax.xlane.f32.xlu0 %v559
        %v618 = vpop.xlane.xlu0 %617
        %619 = vmax.xlane.f32.xlu0 %v562
        %v620 = vpop.xlane.xlu0 %619
        %621 = vmax.xlane.f32.xlu0 %v567
        %v622 = vpop.xlane.xlu0 %621
        %623 = vmax.xlane.f32.xlu0 %v570
        %v624 = vpop.xlane.xlu0 %623
        %625 = vmax.xlane.f32.xlu0 %v575
        %v626 = vpop.xlane.xlu0 %625
        %627 = vmax.xlane.f32.xlu0 %v578
        %v628 = vpop.xlane.xlu0 %627
        %v629 = vmax.f32 %v581, %v598
        %v630 = vmax.f32 %v582, %v600
        %v631 = vmax.f32 %v583, %v602
        %v632 = vmax.f32 %v584, %v604
        %v633 = vmax.f32 %v585, %v606
        %v634 = vmax.f32 %v586, %v608
        %v635 = vmax.f32 %v587, %v610
        %v636 = vmax.f32 %v588, %v612
        %v637 = vmax.f32 %v589, %v614
        %v638 = vmax.f32 %v590, %v616
        %v639 = vmax.f32 %v591, %v618
        %v640 = vmax.f32 %v592, %v620
        %v641 = vmax.f32 %v593, %v622
        %v642 = vmax.f32 %v594, %v624
        %v643 = vmax.f32 %v595, %v626
        %v644 = vmax.f32 %v596, %v628
        %v645 = vsub.f32 %v581, %v629
        %v646 = vsub.f32 %v582, %v630
        %v647 = vsub.f32 %v583, %v631
        %v648 = vsub.f32 %v584, %v632
        %v649 = vsub.f32 %v585, %v633
        %v650 = vsub.f32 %v586, %v634
        %v651 = vsub.f32 %v587, %v635
        %v652 = vsub.f32 %v588, %v636
        %v653 = vsub.f32 %v589, %v637
        %v654 = vsub.f32 %v590, %v638
        %v655 = vsub.f32 %v591, %v639
        %v656 = vsub.f32 %v592, %v640
        %v657 = vsub.f32 %v593, %v641
        %v658 = vsub.f32 %v594, %v642
        %v659 = vsub.f32 %v595, %v643
        %v660 = vsub.f32 %v596, %v644
        %v661 = vmul.f32 %v645, 1.442695
        %v662 = vpow.pop %v661
        %v663 = vmul.f32 %v646, 1.442695
        %v664 = vpow.pop %v663
        %v665 = vmul.f32 %v647, 1.442695
        %v666 = vpow.pop %v665
        %v667 = vmul.f32 %v648, 1.442695
        %v668 = vpow.pop %v667
        %v669 = vmul.f32 %v649, 1.442695
        %v670 = vpow.pop %v669
        %v671 = vmul.f32 %v650, 1.442695
        %v672 = vpow.pop %v671
        %v673 = vmul.f32 %v651, 1.442695
        %v674 = vpow.pop %v673
        %v675 = vmul.f32 %v652, 1.442695
        %v676 = vpow.pop %v675
        %v677 = vmul.f32 %v653, 1.442695
        %v678 = vpow.pop %v677
        %v679 = vmul.f32 %v654, 1.442695
        %v680 = vpow.pop %v679
        %v681 = vmul.f32 %v655, 1.442695
        %v682 = vpow.pop %v681
        %v683 = vmul.f32 %v656, 1.442695
        %v684 = vpow.pop %v683
        %v685 = vmul.f32 %v657, 1.442695
        %v686 = vpow.pop %v685
        %v687 = vmul.f32 %v658, 1.442695
        %v688 = vpow.pop %v687
        %v689 = vmul.f32 %v659, 1.442695
        %v690 = vpow.pop %v689
        %v691 = vmul.f32 %v660, 1.442695
        %v692 = vpow.pop %v691
        %v693 = vsub.f32 %v519, %v629
        %v694 = vsub.f32 %v522, %v630
        %v695 = vsub.f32 %v527, %v631
        %v696 = vsub.f32 %v530, %v632
        %v697 = vsub.f32 %v535, %v633
        %v698 = vsub.f32 %v538, %v634
        %v699 = vsub.f32 %v543, %v635
        %v700 = vsub.f32 %v546, %v636
        %v701 = vsub.f32 %v551, %v637
        %v702 = vsub.f32 %v554, %v638
        %v703 = vsub.f32 %v559, %v639
        %v704 = vsub.f32 %v562, %v640
        %v705 = vsub.f32 %v567, %v641
        %v706 = vsub.f32 %v570, %v642
        %v707 = vsub.f32 %v575, %v643
        %v708 = vsub.f32 %v578, %v644
        %v709 = vpack.c.bf16 %v694, %v693
        %v710 = vpack.c.bf16 %v696, %v695
        %v711 = vpack.c.bf16 %v698, %v697
        %v712 = vpack.c.bf16 %v700, %v699
        %v713 = vpack.c.bf16 %v702, %v701
        %v714 = vpack.c.bf16 %v704, %v703
        %v715 = vpack.c.bf16 %v706, %v705
        %v716 = vpack.c.bf16 %v708, %v707
        %v718 = vmul.bf16 %v709, 1069105081
        %v719 = vpow.bf16.pop %v718
        %v721 = vmul.bf16 %v710, 1069105081
        %v722 = vpow.bf16.pop %v721
        %v724 = vmul.bf16 %v711, 1069105081
        %v725 = vpow.bf16.pop %v724
        %v727 = vmul.bf16 %v712, 1069105081
        %v728 = vpow.bf16.pop %v727
        %v730 = vmul.bf16 %v713, 1069105081
        %v731 = vpow.bf16.pop %v730
        %v733 = vmul.bf16 %v714, 1069105081
        %v734 = vpow.bf16.pop %v733
        %v736 = vmul.bf16 %v715, 1069105081
        %v737 = vpow.bf16.pop %v736
        %v739 = vmul.bf16 %v716, 1069105081
        %v740 = vpow.bf16.pop %v739
        %v741 = vunpack.c.l.bf16 %v719
        %v742 = vunpack.c.h.bf16 %v719
        %v743 = vunpack.c.l.bf16 %v722
        %v744 = vunpack.c.h.bf16 %v722
        %v745 = vunpack.c.l.bf16 %v725
        %v746 = vunpack.c.h.bf16 %v725
        %v747 = vunpack.c.l.bf16 %v728
        %v748 = vunpack.c.h.bf16 %v728
        %v749 = vunpack.c.l.bf16 %v731
        %v750 = vunpack.c.h.bf16 %v731
        %v751 = vunpack.c.l.bf16 %v734
        %v752 = vunpack.c.h.bf16 %v734
        %v753 = vunpack.c.l.bf16 %v737
        %v754 = vunpack.c.h.bf16 %v737
        %v755 = vunpack.c.l.bf16 %v740
        %v756 = vunpack.c.h.bf16 %v740
        %v757 = vld [vmem:[#allocation3] sm:$0xff]
        %v758 = vld [vmem:[#allocation3 + $0x8] sm:$0xff]
        %v759 = vld [vmem:[#allocation3 + $0x10] sm:$0xff]
        %v760 = vld [vmem:[#allocation3 + $0x18] sm:$0xff]
        %v761 = vld [vmem:[#allocation3 + $0x20] sm:$0xff]
        %v762 = vld [vmem:[#allocation3 + $0x28] sm:$0xff]
        %v763 = vld [vmem:[#allocation3 + $0x30] sm:$0xff]
        %v764 = vld [vmem:[#allocation3 + $0x38] sm:$0xff]
        %v765 = vld [vmem:[#allocation3 + $0x40] sm:$0xff]
        %v766 = vld [vmem:[#allocation3 + $0x48] sm:$0xff]
        %v767 = vld [vmem:[#allocation3 + $0x50] sm:$0xff]
        %v768 = vld [vmem:[#allocation3 + $0x58] sm:$0xff]
        %v769 = vld [vmem:[#allocation3 + $0x60] sm:$0xff]
        %v770 = vld [vmem:[#allocation3 + $0x68] sm:$0xff]
        %v771 = vld [vmem:[#allocation3 + $0x70] sm:$0xff]
        %v772 = vld [vmem:[#allocation3 + $0x78] sm:$0xff]
        %v773 = vmul.f32 %v662, %v757
        %v774 = vmul.f32 %v664, %v758
        %v775 = vmul.f32 %v666, %v759
        %v776 = vmul.f32 %v668, %v760
        %v777 = vmul.f32 %v670, %v761
        %v778 = vmul.f32 %v672, %v762
        %v779 = vmul.f32 %v674, %v763
        %v780 = vmul.f32 %v676, %v764
        %v781 = vmul.f32 %v678, %v765
        %v782 = vmul.f32 %v680, %v766
        %v783 = vmul.f32 %v682, %v767
        %v784 = vmul.f32 %v684, %v768
        %v785 = vmul.f32 %v686, %v769
        %v786 = vmul.f32 %v688, %v770
        %v787 = vmul.f32 %v690, %v771
        %v788 = vmul.f32 %v692, %v772
        %789 = vadd.xlane.f32.xlu0 %v741
        %v790 = vpop.xlane.xlu0 %789
        %791 = vadd.xlane.f32.xlu0 %v742
        %v792 = vpop.xlane.xlu0 %791
        %793 = vadd.xlane.f32.xlu0 %v743
        %v794 = vpop.xlane.xlu0 %793
        %795 = vadd.xlane.f32.xlu0 %v744
        %v796 = vpop.xlane.xlu0 %795
        %797 = vadd.xlane.f32.xlu0 %v745
        %v798 = vpop.xlane.xlu0 %797
        %799 = vadd.xlane.f32.xlu0 %v746
        %v800 = vpop.xlane.xlu0 %799
        %801 = vadd.xlane.f32.xlu0 %v747
        %v802 = vpop.xlane.xlu0 %801
        %803 = vadd.xlane.f32.xlu0 %v748
        %v804 = vpop.xlane.xlu0 %803
        %805 = vadd.xlane.f32.xlu0 %v749
        %v806 = vpop.xlane.xlu0 %805
        %807 = vadd.xlane.f32.xlu0 %v750
        %v808 = vpop.xlane.xlu0 %807
        %809 = vadd.xlane.f32.xlu0 %v751
        %v810 = vpop.xlane.xlu0 %809
        %811 = vadd.xlane.f32.xlu0 %v752
        %v812 = vpop.xlane.xlu0 %811
        %813 = vadd.xlane.f32.xlu0 %v753
        %v814 = vpop.xlane.xlu0 %813
        %815 = vadd.xlane.f32.xlu0 %v754
        %v816 = vpop.xlane.xlu0 %815
        %817 = vadd.xlane.f32.xlu0 %v755
        %v818 = vpop.xlane.xlu0 %817
        %819 = vadd.xlane.f32.xlu0 %v756
        %v820 = vpop.xlane.xlu0 %819
        %v821 = vadd.f32 %v773, %v790
        %v822 = vadd.f32 %v774, %v792
        %v823 = vadd.f32 %v775, %v794
        %v824 = vadd.f32 %v776, %v796
        %v825 = vadd.f32 %v777, %v798
        %v826 = vadd.f32 %v778, %v800
        %v827 = vadd.f32 %v779, %v802
        %v828 = vadd.f32 %v780, %v804
        %v829 = vadd.f32 %v781, %v806
        %v830 = vadd.f32 %v782, %v808
        %v831 = vadd.f32 %v783, %v810
        %v832 = vadd.f32 %v784, %v812
        %v833 = vadd.f32 %v785, %v814
        %v834 = vadd.f32 %v786, %v816
        %v835 = vadd.f32 %v787, %v818
        %v836 = vadd.f32 %v788, %v820
        %837 = vst [vmem:[#allocation3] sm:$0xff] %v821
        %838 = vst [vmem:[#allocation3 + $0x8] sm:$0xff] %v822
        %839 = vst [vmem:[#allocation3 + $0x10] sm:$0xff] %v823
        %840 = vst [vmem:[#allocation3 + $0x18] sm:$0xff] %v824
        %841 = vst [vmem:[#allocation3 + $0x20] sm:$0xff] %v825
        %842 = vst [vmem:[#allocation3 + $0x28] sm:$0xff] %v826
        %843 = vst [vmem:[#allocation3 + $0x30] sm:$0xff] %v827
        %844 = vst [vmem:[#allocation3 + $0x38] sm:$0xff] %v828
        %845 = vst [vmem:[#allocation3 + $0x40] sm:$0xff] %v829
        %846 = vst [vmem:[#allocation3 + $0x48] sm:$0xff] %v830
        %847 = vst [vmem:[#allocation3 + $0x50] sm:$0xff] %v831
        %848 = vst [vmem:[#allocation3 + $0x58] sm:$0xff] %v832
        %849 = vst [vmem:[#allocation3 + $0x60] sm:$0xff] %v833
        %850 = vst [vmem:[#allocation3 + $0x68] sm:$0xff] %v834
        %851 = vst [vmem:[#allocation3 + $0x70] sm:$0xff] %v835
        %852 = vst [vmem:[#allocation3 + $0x78] sm:$0xff] %v836
        %v853 = vld [vmem:[#allocation4] sm:$0xff]
        %v854 = vld [vmem:[#allocation4 + $0x8] sm:$0xff]
        %v855 = vld [vmem:[#allocation4 + $0x10] sm:$0xff]
        %v856 = vld [vmem:[#allocation4 + $0x18] sm:$0xff]
        %v857 = vld [vmem:[#allocation4 + $0x20] sm:$0xff]
        %v858 = vld [vmem:[#allocation4 + $0x28] sm:$0xff]
        %v859 = vld [vmem:[#allocation4 + $0x30] sm:$0xff]
        %v860 = vld [vmem:[#allocation4 + $0x38] sm:$0xff]
        %v861 = vld [vmem:[#allocation4 + $0x40] sm:$0xff]
        %v862 = vld [vmem:[#allocation4 + $0x48] sm:$0xff]
        %v863 = vld [vmem:[#allocation4 + $0x50] sm:$0xff]
        %v864 = vld [vmem:[#allocation4 + $0x58] sm:$0xff]
        %v865 = vld [vmem:[#allocation4 + $0x60] sm:$0xff]
        %v866 = vld [vmem:[#allocation4 + $0x68] sm:$0xff]
        %v867 = vld [vmem:[#allocation4 + $0x70] sm:$0xff]
        %v868 = vld [vmem:[#allocation4 + $0x78] sm:$0xff]
        %v869 = vmul.f32 %v662, %v853
        %v870 = vmul.f32 %v664, %v854
        %v871 = vmul.f32 %v666, %v855
        %v872 = vmul.f32 %v668, %v856
        %v873 = vmul.f32 %v670, %v857
        %v874 = vmul.f32 %v672, %v858
        %v875 = vmul.f32 %v674, %v859
        %v876 = vmul.f32 %v676, %v860
        %v877 = vmul.f32 %v678, %v861
        %v878 = vmul.f32 %v680, %v862
        %v879 = vmul.f32 %v682, %v863
        %v880 = vmul.f32 %v684, %v864
        %v881 = vmul.f32 %v686, %v865
        %v882 = vmul.f32 %v688, %v866
        %v883 = vmul.f32 %v690, %v867
        %v884 = vmul.f32 %v692, %v868
        %v885 = vld [vmem:[%s266] sm:$0xf]
        %v886 = vld [vmem:[%s266 + $0x4] sm:$0xf]
        %v887 = vld [vmem:[%s266 + $0x8] sm:$0xf]
        %v888 = vld [vmem:[%s266 + $0xc] sm:$0xf]
        %v889 = vld [vmem:[%s266 + $0x10] sm:$0xf]
        %v890 = vld [vmem:[%s266 + $0x14] sm:$0xf]
        %v891 = vld [vmem:[%s266 + $0x18] sm:$0xf]
        %v892 = vld [vmem:[%s266 + $0x1c] sm:$0xf]
        %v893 = vld [vmem:[%s266 + $0x20] sm:$0xf]
        %v894 = vld [vmem:[%s266 + $0x24] sm:$0xf]
        %v895 = vld [vmem:[%s266 + $0x28] sm:$0xf]
        %v896 = vld [vmem:[%s266 + $0x2c] sm:$0xf]
        %v897 = vld [vmem:[%s266 + $0x30] sm:$0xf]
        %v898 = vld [vmem:[%s266 + $0x34] sm:$0xf]
        %v899 = vld [vmem:[%s266 + $0x38] sm:$0xf]
        %v900 = vld [vmem:[%s266 + $0x3c] sm:$0xf]
        %v917 = vunpack.c.l.b16 %v885
        %v918 = vunpack.c.l.b16 %v886
        %v919 = vunpack.c.l.b16 %v887
        %v920 = vunpack.c.l.b16 %v888
        %v921 = vunpack.c.l.b16 %v889
        %v922 = vunpack.c.l.b16 %v890
        %v923 = vunpack.c.l.b16 %v891
        %v924 = vunpack.c.l.b16 %v892
        %v925 = vunpack.c.l.b16 %v893
        %v926 = vunpack.c.l.b16 %v894
        %v927 = vunpack.c.l.b16 %v895
        %v928 = vunpack.c.l.b16 %v896
        %v929 = vunpack.c.l.b16 %v897
        %v930 = vunpack.c.l.b16 %v898
        %v931 = vunpack.c.l.b16 %v899
        %v932 = vunpack.c.l.b16 %v900
        %v933 = vpack.c.b16 %v918, %v917
        %v934 = vpack.c.b16 %v920, %v919
        %v935 = vpack.c.b16 %v922, %v921
        %v936 = vpack.c.b16 %v924, %v923
        %v937 = vpack.c.b16 %v926, %v925
        %v938 = vpack.c.b16 %v928, %v927
        %v939 = vpack.c.b16 %v930, %v929
        %v940 = vpack.c.b16 %v932, %v931
        %949 = vmatprep.subr.bf16.mxu0 0
        %950 = vmatpush1.bf16.msra.mxu0 %v940
        %951 = vmatprep.subr.bf16.mxu0 0
        %952 = vmatpush1.bf16.msra.mxu0 %v939
        %953 = vmatprep.subr.bf16.mxu0 0
        %954 = vmatpush1.bf16.msra.mxu0 %v938
        %955 = vmatprep.subr.bf16.mxu0 0
        %956 = vmatpush1.bf16.msra.mxu0 %v937
        %957 = vmatprep.subr.bf16.mxu0 0
        %958 = vmatpush1.bf16.msra.mxu0 %v936
        %959 = vmatprep.subr.bf16.mxu0 0
        %960 = vmatpush1.bf16.msra.mxu0 %v935
        %961 = vmatprep.subr.bf16.mxu0 0
        %962 = vmatpush1.bf16.msra.mxu0 %v934
        %963 = vmatprep.subr.bf16.mxu0 0
        %964 = vmatpush1.bf16.msra.mxu0 %v933
        %965 = vmatprep.subr.bf16.mxu0 0
        %966 = vmatpush2.bf16.msra.mxu0 0
        %967 = vmatprep.subr.bf16.mxu0 0
        %968 = vmatpush2.bf16.msra.mxu0 0
        %969 = vmatprep.subr.bf16.mxu0 0
        %970 = vmatpush2.bf16.msra.mxu0 0
        %971 = vmatprep.subr.bf16.mxu0 0
        %972 = vmatpush2.bf16.msra.mxu0 0
        %973 = vmatprep.subr.bf16.mxu0 0
        %974 = vmatpush2.bf16.msra.mxu0 0
        %975 = vmatprep.subr.bf16.mxu0 0
        %976 = vmatpush2.bf16.msra.mxu0 0
        %977 = vmatprep.subr.bf16.mxu0 0
        %978 = vmatpush2.bf16.msra.mxu0 0
        %979 = vmatprep.subr.bf16.mxu0 0
        %980 = vmatpush2.bf16.msra.mxu0 0
        %981 = vmatprep.mubr.bf16.mxu0 0
        %982 = vmatmul.mubr.bf16.gmra.mxu0 %v719
        %v983 = vpop.f32.mrf.mxu0
        %v984 = vadd.f32 0.0, %v983
        %v985 = vpop.f32.mrf.mxu0
        %v986 = vpop.f32.mrf.mxu0
        %v987 = vadd.f32 0.0, %v986
        %v988 = vpop.f32.mrf.mxu0
        %989 = vmatprep.mubr.bf16.mxu0 0
        %990 = vmatmul.mubr.bf16.gmra.mxu0 %v722
        %v991 = vpop.f32.mrf.mxu0
        %v992 = vadd.f32 0.0, %v991
        %v993 = vpop.f32.mrf.mxu0
        %v994 = vpop.f32.mrf.mxu0
        %v995 = vadd.f32 0.0, %v994
        %v996 = vpop.f32.mrf.mxu0
        %997 = vmatprep.mubr.bf16.mxu0 0
        %998 = vmatmul.mubr.bf16.gmra.mxu0 %v725
        %v999 = vpop.f32.mrf.mxu0
        %v1000 = vadd.f32 0.0, %v999
        %v1001 = vpop.f32.mrf.mxu0
        %v1002 = vpop.f32.mrf.mxu0
        %v1003 = vadd.f32 0.0, %v1002
        %v1004 = vpop.f32.mrf.mxu0
        %1005 = vmatprep.mubr.bf16.mxu0 0
        %1006 = vmatmul.mubr.bf16.gmra.mxu0 %v728
        %v1007 = vpop.f32.mrf.mxu0
        %v1008 = vadd.f32 0.0, %v1007
        %v1009 = vpop.f32.mrf.mxu0
        %v1010 = vpop.f32.mrf.mxu0
        %v1011 = vadd.f32 0.0, %v1010
        %v1012 = vpop.f32.mrf.mxu0
        %1013 = vmatprep.mubr.bf16.mxu0 0
        %1014 = vmatmul.mubr.bf16.gmra.mxu0 %v731
        %v1015 = vpop.f32.mrf.mxu0
        %v1016 = vadd.f32 0.0, %v1015
        %v1017 = vpop.f32.mrf.mxu0
        %v1018 = vpop.f32.mrf.mxu0
        %v1019 = vadd.f32 0.0, %v1018
        %v1020 = vpop.f32.mrf.mxu0
        %1021 = vmatprep.mubr.bf16.mxu0 0
        %1022 = vmatmul.mubr.bf16.gmra.mxu0 %v734
        %v1023 = vpop.f32.mrf.mxu0
        %v1024 = vadd.f32 0.0, %v1023
        %v1025 = vpop.f32.mrf.mxu0
        %v1026 = vpop.f32.mrf.mxu0
        %v1027 = vadd.f32 0.0, %v1026
        %v1028 = vpop.f32.mrf.mxu0
        %1029 = vmatprep.mubr.bf16.mxu0 0
        %1030 = vmatmul.mubr.bf16.gmra.mxu0 %v737
        %v1031 = vpop.f32.mrf.mxu0
        %v1032 = vadd.f32 0.0, %v1031
        %v1033 = vpop.f32.mrf.mxu0
        %v1034 = vpop.f32.mrf.mxu0
        %v1035 = vadd.f32 0.0, %v1034
        %v1036 = vpop.f32.mrf.mxu0
        %1037 = vmatprep.mubr.bf16.mxu0 0
        %1038 = vmatmul.mubr.bf16.gmra.mxu0 %v740
        %v1039 = vpop.f32.mrf.mxu0
        %v1040 = vadd.f32 0.0, %v1039
        %v1041 = vpop.f32.mrf.mxu0
        %v1042 = vpop.f32.mrf.mxu0
        %v1043 = vadd.f32 0.0, %v1042
        %v1044 = vpop.f32.mrf.mxu0
        %1045 = vdwg.mxu0
        %v1046 = vadd.f32 %v869, %v984
        %v1047 = vadd.f32 %v870, %v987
        %v1048 = vadd.f32 %v871, %v992
        %v1049 = vadd.f32 %v872, %v995
        %v1050 = vadd.f32 %v873, %v1000
        %v1051 = vadd.f32 %v874, %v1003
        %v1052 = vadd.f32 %v875, %v1008
        %v1053 = vadd.f32 %v876, %v1011
        %v1054 = vadd.f32 %v877, %v1016
        %v1055 = vadd.f32 %v878, %v1019
        %v1056 = vadd.f32 %v879, %v1024
        %v1057 = vadd.f32 %v880, %v1027
        %v1058 = vadd.f32 %v881, %v1032
        %v1059 = vadd.f32 %v882, %v1035
        %v1060 = vadd.f32 %v883, %v1040
        %v1061 = vadd.f32 %v884, %v1043
        %1062 = vst [vmem:[#allocation4] sm:$0xff] %v1046
        %1063 = vst [vmem:[#allocation4 + $0x8] sm:$0xff] %v1047
        %1064 = vst [vmem:[#allocation4 + $0x10] sm:$0xff] %v1048
        %1065 = vst [vmem:[#allocation4 + $0x18] sm:$0xff] %v1049
        %1066 = vst [vmem:[#allocation4 + $0x20] sm:$0xff] %v1050
        %1067 = vst [vmem:[#allocation4 + $0x28] sm:$0xff] %v1051
        %1068 = vst [vmem:[#allocation4 + $0x30] sm:$0xff] %v1052
        %1069 = vst [vmem:[#allocation4 + $0x38] sm:$0xff] %v1053
        %1070 = vst [vmem:[#allocation4 + $0x40] sm:$0xff] %v1054
        %1071 = vst [vmem:[#allocation4 + $0x48] sm:$0xff] %v1055
        %1072 = vst [vmem:[#allocation4 + $0x50] sm:$0xff] %v1056
        %1073 = vst [vmem:[#allocation4 + $0x58] sm:$0xff] %v1057
        %1074 = vst [vmem:[#allocation4 + $0x60] sm:$0xff] %v1058
        %1075 = vst [vmem:[#allocation4 + $0x68] sm:$0xff] %v1059
        %1076 = vst [vmem:[#allocation4 + $0x70] sm:$0xff] %v1060
        %1077 = vst [vmem:[#allocation4 + $0x78] sm:$0xff] %v1061
        %1078 = vst [vmem:[#allocation2] sm:$0xff] %v629
        %1079 = vst [vmem:[#allocation2 + $0x8] sm:$0xff] %v630
        %1080 = vst [vmem:[#allocation2 + $0x10] sm:$0xff] %v631
        %1081 = vst [vmem:[#allocation2 + $0x18] sm:$0xff] %v632
        %1082 = vst [vmem:[#allocation2 + $0x20] sm:$0xff] %v633
        %1083 = vst [vmem:[#allocation2 + $0x28] sm:$0xff] %v634
        %1084 = vst [vmem:[#allocation2 + $0x30] sm:$0xff] %v635
        %1085 = vst [vmem:[#allocation2 + $0x38] sm:$0xff] %v636
        %1086 = vst [vmem:[#allocation2 + $0x40] sm:$0xff] %v637
        %1087 = vst [vmem:[#allocation2 + $0x48] sm:$0xff] %v638
        %1088 = vst [vmem:[#allocation2 + $0x50] sm:$0xff] %v639
        %1089 = vst [vmem:[#allocation2 + $0x58] sm:$0xff] %v640
        %1090 = vst [vmem:[#allocation2 + $0x60] sm:$0xff] %v641
        %1091 = vst [vmem:[#allocation2 + $0x68] sm:$0xff] %v642
        %1092 = vst [vmem:[#allocation2 + $0x70] sm:$0xff] %v643
        %1093 = vst [vmem:[#allocation2 + $0x78] sm:$0xff] %v644
        // Predicated region
        $region49: #{tpu_custom_call.1} parent=31 // pred_check
          %p1094 = pneg %p304
        $region50: #{tpu_custom_call.1} parent=31 // pred_check_branch
          %1096 = sbr.rel (%p1094) target = $region52
        $region51: #{tpu_custom_call.1} parent=31 // pred_region
          %v1097 = vld [vmem:[#allocation3] sm:$0xff]
          %v1098 = vld [vmem:[#allocation3 + $0x8] sm:$0xff]
          %v1099 = vld [vmem:[#allocation3 + $0x10] sm:$0xff]
          %v1100 = vld [vmem:[#allocation3 + $0x18] sm:$0xff]
          %v1101 = vld [vmem:[#allocation3 + $0x20] sm:$0xff]
          %v1102 = vld [vmem:[#allocation3 + $0x28] sm:$0xff]
          %v1103 = vld [vmem:[#allocation3 + $0x30] sm:$0xff]
          %v1104 = vld [vmem:[#allocation3 + $0x38] sm:$0xff]
          %v1105 = vld [vmem:[#allocation3 + $0x40] sm:$0xff]
          %v1106 = vld [vmem:[#allocation3 + $0x48] sm:$0xff]
          %v1107 = vld [vmem:[#allocation3 + $0x50] sm:$0xff]
          %v1108 = vld [vmem:[#allocation3 + $0x58] sm:$0xff]
          %v1109 = vld [vmem:[#allocation3 + $0x60] sm:$0xff]
          %v1110 = vld [vmem:[#allocation3 + $0x68] sm:$0xff]
          %v1111 = vld [vmem:[#allocation3 + $0x70] sm:$0xff]
          %v1112 = vld [vmem:[#allocation3 + $0x78] sm:$0xff]
          %v1113 = vrcp.pop %v1097
          %v1114 = vrcp.pop %v1098
          %v1115 = vrcp.pop %v1099
          %v1116 = vrcp.pop %v1100
          %v1117 = vrcp.pop %v1101
          %v1118 = vrcp.pop %v1102
          %v1119 = vrcp.pop %v1103
          %v1120 = vrcp.pop %v1104
          %v1121 = vrcp.pop %v1105
          %v1122 = vrcp.pop %v1106
          %v1123 = vrcp.pop %v1107
          %v1124 = vrcp.pop %v1108
          %v1125 = vrcp.pop %v1109
          %v1126 = vrcp.pop %v1110
          %v1127 = vrcp.pop %v1111
          %v1128 = vrcp.pop %v1112
          %v1129 = vld [vmem:[#allocation4] sm:$0xff]
          %v1130 = vld [vmem:[#allocation4 + $0x8] sm:$0xff]
          %v1131 = vld [vmem:[#allocation4 + $0x10] sm:$0xff]
          %v1132 = vld [vmem:[#allocation4 + $0x18] sm:$0xff]
          %v1133 = vld [vmem:[#allocation4 + $0x20] sm:$0xff]
          %v1134 = vld [vmem:[#allocation4 + $0x28] sm:$0xff]
          %v1135 = vld [vmem:[#allocation4 + $0x30] sm:$0xff]
          %v1136 = vld [vmem:[#allocation4 + $0x38] sm:$0xff]
          %v1137 = vld [vmem:[#allocation4 + $0x40] sm:$0xff]
          %v1138 = vld [vmem:[#allocation4 + $0x48] sm:$0xff]
          %v1139 = vld [vmem:[#allocation4 + $0x50] sm:$0xff]
          %v1140 = vld [vmem:[#allocation4 + $0x58] sm:$0xff]
          %v1141 = vld [vmem:[#allocation4 + $0x60] sm:$0xff]
          %v1142 = vld [vmem:[#allocation4 + $0x68] sm:$0xff]
          %v1143 = vld [vmem:[#allocation4 + $0x70] sm:$0xff]
          %v1144 = vld [vmem:[#allocation4 + $0x78] sm:$0xff]
          %v1145 = vmul.f32 %v1129, %v1113
          %v1146 = vmul.f32 %v1130, %v1114
          %v1147 = vmul.f32 %v1131, %v1115
          %v1148 = vmul.f32 %v1132, %v1116
          %v1149 = vmul.f32 %v1133, %v1117
          %v1150 = vmul.f32 %v1134, %v1118
          %v1151 = vmul.f32 %v1135, %v1119
          %v1152 = vmul.f32 %v1136, %v1120
          %v1153 = vmul.f32 %v1137, %v1121
          %v1154 = vmul.f32 %v1138, %v1122
          %v1155 = vmul.f32 %v1139, %v1123
          %v1156 = vmul.f32 %v1140, %v1124
          %v1157 = vmul.f32 %v1141, %v1125
          %v1158 = vmul.f32 %v1142, %v1126
          %v1159 = vmul.f32 %v1143, %v1127
          %v1160 = vmul.f32 %v1144, %v1128
          %1161 = vst [vmem:[%s298] sm:$0xff] %v1145
          %1162 = vst [vmem:[%s298 + $0x8] sm:$0xff] %v1146
          %1163 = vst [vmem:[%s298 + $0x10] sm:$0xff] %v1147
          %1164 = vst [vmem:[%s298 + $0x18] sm:$0xff] %v1148
          %1165 = vst [vmem:[%s298 + $0x20] sm:$0xff] %v1149
          %1166 = vst [vmem:[%s298 + $0x28] sm:$0xff] %v1150
          %1167 = vst [vmem:[%s298 + $0x30] sm:$0xff] %v1151
          %1168 = vst [vmem:[%s298 + $0x38] sm:$0xff] %v1152
          %1169 = vst [vmem:[%s298 + $0x40] sm:$0xff] %v1153
          %1170 = vst [vmem:[%s298 + $0x48] sm:$0xff] %v1154
          %1171 = vst [vmem:[%s298 + $0x50] sm:$0xff] %v1155
          %1172 = vst [vmem:[%s298 + $0x58] sm:$0xff] %v1156
          %1173 = vst [vmem:[%s298 + $0x60] sm:$0xff] %v1157
          %1174 = vst [vmem:[%s298 + $0x68] sm:$0xff] %v1158
          %1175 = vst [vmem:[%s298 + $0x70] sm:$0xff] %v1159
          %1176 = vst [vmem:[%s298 + $0x78] sm:$0xff] %v1160
        $region52: #{tpu_custom_call.1} parent=31 // pred_fallthru
          _
        %s1177 = sand.u32 %s136, 1
        %s1178 = scalar_lea.sflag [#allocation7], %s1177
        %s1179 = sand.u32 %s136, 1
        %s1180 = smul.addr %s1179, 128
        %s1181 = scalar_lea.vmem [#allocation11], %s1180
        // Predicated region
        $region53: #{tpu_custom_call.1} parent=31 // pred_check
          %p1182 = pneg %p146
        $region54: #{tpu_custom_call.1} parent=31 // pred_check_branch
          %1184 = sbr.rel (%p1182) target = $region56
        $region55: #{tpu_custom_call.1} parent=31 // pred_region
          %s1185 = smul.u32 16, %s29
          %s1187 = ssub.s32 2048, 2048
          %1188 = vsyncadd %s1178, %s1187
          %s1189 = smul.addr %s1185, 4
          %s1190 = sadd.s32 %s28, %s1189
          %s1191 = smul.addr %s1190, 128
          %s1192 = scalar_lea.hbm %s3, %s1191
          %s1193 = sshll.u32 %s1181, 4
          %s1194 = int_to_ptr.vmem [resolvable:$true] %s1193
          %1199 = dma.vmem_to_hbm [thread:$0]  %s1194, 2048, %s1192, %s1178, 128, 512, 8
        $region56: #{tpu_custom_call.1} parent=31 // pred_fallthru
          _
      $region32: #{tpu_custom_call.1} parent=5 // pred_fallthru
        _
      %p1200 = scmp.le.s32.totalorder 2, %s18
      // Predicated region
      $region57: #{tpu_custom_call.1} parent=5 // pred_check
        %p1201 = pneg %p1200
      $region58: #{tpu_custom_call.1} parent=5 // pred_check_branch
        %1203 = sbr.rel (%p1201) target = $region60
      $region59: #{tpu_custom_call.1} parent=5 // pred_region
        %s1204 = ssub.s32 %s18, 2
        // Predicated region
        $region61: #{tpu_custom_call.1} parent=59 // pred_check
          %p1205 = pneg %p152
        $region62: #{tpu_custom_call.1} parent=59 // pred_check_branch
          %1207 = sbr.rel (%p1205) target = $region64
        $region63: #{tpu_custom_call.1} parent=59 // pred_region
          %s1208 = sand.u32 %s137, 1
          %s1209 = scalar_lea.sflag [#allocation7], %s1208
          %s1210 = sand.u32 %s137, 1
          %s1211 = smul.addr %s1210, 128
          %s1212 = scalar_lea.vmem [#allocation11], %s1211
          %1213 = dma.done %s1209, 2048
        $region64: #{tpu_custom_call.1} parent=59 // pred_fallthru
          _
      $region60: #{tpu_custom_call.1} parent=5 // pred_fallthru
        _
    $region6: #{tpu_custom_call.1} parent=1 // loop_footer
      %s22 = sadd.s32 1, %s18
    $region7: #{tpu_custom_call.1} parent=1 // loop_footer_branch
      %17 = sbr.rel target = $region3
    $region8: #{tpu_custom_call.1} parent=1 // loop_exit
      _
    %1214 = vsyncpa [#allocation6], 1
    %s1215 = scalar_lea.sflag [#allocation6], 1
    %1216 = vsyncpa %s1215, 1
    %1217 = vsyncpa [#allocation9], 1
    %s1218 = scalar_lea.sflag [#allocation9], 1
    %1219 = vsyncpa %s1218, 1
    %1220 = vsyncpa [#allocation7], 1
    %s1221 = scalar_lea.sflag [#allocation7], 1
    %1222 = vsyncpa %s1221, 1

</llo_original>
